<compile_context>
chip_gen: v5e
topology: v5e:2x2
jax: 0.10.0
libtpu: 0.0.40
codegen_flags: <defaults>
</compile_context>

<pallas_src>
import functools

import jax
import jax.numpy as jnp
import numpy as np
from jax.experimental import pallas as pl
from jax.experimental.pallas import tpu as pltpu

EPS = 1e-5


def _basic_block_kernel(C, OFF, x_ref, wb1_ref, wb2_ref, g1_ref, b1_ref,
                        g2_ref, b2_ref, out_ref, pad_ref):
    """conv3x3 -> BN -> ReLU -> conv3x3 -> BN -> (+residual) -> ReLU.

    Activations: (N, H, L) lane-dense with L = W*C.
    pad_ref: (N, Hs, 3L) row-im2col scratch; lane section kh holds the
    activation shifted by (kh-1) rows so one aligned (N*H, 3L) read feeds a
    single K=3L MXU dot per conv.  Conv weights arrive pre-stacked as
    (3L, L) banded matrices (kw taps + W padding folded in); gamma/beta come
    pre-broadcast to (1, L).
    """
    N, H, L = x_ref.shape
    L3 = 3 * L
    W = L // C
    inv_cnt = 1.0 / float(N * H * W)

    def scatter_im2col(act):
        # Section kh needs act row (h + kh - 1) at padded row OFF + h.
        # Center section is fully (8,128)-aligned; the +/-1 shifted sections
        # are off by one sublane row (masked stores, no full relayout pass).
        pad_ref[:, OFF + 1:OFF + 1 + H, 0:L] = act           # kh = 0 (row above)
        pad_ref[:, OFF:OFF + H, L:2 * L] = act               # kh = 1 (center)
        pad_ref[:, OFF - 1:OFF - 1 + H, 2 * L:3 * L] = act   # kh = 2 (row below)

    def conv3x3(w_ref):
        # Single K = 3L dot; the read window starts at a multiple of 8 sublane
        # rows and spans whole lane tiles -> no relayout copy before the MXU.
        patch = pad_ref[:, OFF:OFF + H, :].reshape(N * H, L3)
        return jnp.dot(patch, w_ref[...], preferred_element_type=jnp.float32)

    def batchnorm(y, gamma_lane, beta_lane):
        # Train-mode BN (batch stats, biased variance), single pass.
        # TODO(synk): switch to shifted two-pass / Welford if reused at scale.
        s1 = jnp.sum(y, axis=0, keepdims=True)        # (1, L)
        s2 = jnp.sum(y * y, axis=0, keepdims=True)    # (1, L)
        # Segmented all-reduce over the W lane groups sharing a channel:
        # log2(W) XLU lane rotations leave every lane holding its channel's
        # total, already broadcast back across W.  Exact f32, cheap slot.
        step = C
        while step < L:
            s1 = s1 + pltpu.roll(s1, shift=step, axis=1)
            s2 = s2 + pltpu.roll(s2, shift=step, axis=1)
            step *= 2
        mean = s1 * inv_cnt
        var = jnp.maximum(s2 * inv_cnt - mean * mean, 0.0)
        scale = gamma_lane * jax.lax.rsqrt(var + EPS)
        shift = beta_lane - mean * scale
        return y * scale + shift

    # Only padded rows ever read are the top row of section 0 and the bottom
    # row of section 2; they are never overwritten, so zero them exactly once.
    zrow = jnp.zeros((N, 1, L), jnp.float32)
    pad_ref[:, OFF:OFF + 1, 0:L] = zrow
    pad_ref[:, OFF + H - 1:OFF + H, 2 * L:3 * L] = zrow

    x = x_ref[...]

    # conv1 -> bn1 -> relu
    scatter_im2col(x)
    h = conv3x3(wb1_ref)
    h = jnp.maximum(batchnorm(h, g1_ref[...], b1_ref[...]), 0.0)

    # conv2 -> bn2 (same im2col scratch reused; border zeros untouched)
    scatter_im2col(h.reshape(N, H, L))
    o = conv3x3(wb2_ref)
    o = batchnorm(o, g2_ref[...], b2_ref[...])

    # residual add (stride=1, downsample=None -> residual == x) -> relu
    o = jnp.maximum(o + x.reshape(N * H, L), 0.0)
    out_ref[...] = o.reshape(N, H, L)


def _banded_conv_weight(w_oihw, W):
    """(Cout, Cin, 3, 3) -> stacked banded matrix (3*W*Cin, W*Cout).

    band[kh, wi*Cin + ci, wo*Cout + co] = w[co, ci, kh, wi - wo + 1]
    when |wi - wo| <= 1, else 0 — kw taps and padding=1 along W folded in.
    The three kh taps are stacked along rows to match the lane-stacked
    im2col, so each conv is a single K = 3*W*Cin matmul.
    """
    Cout, Cin = w_oihw.shape[0], w_oihw.shape[1]
    wt = jnp.transpose(w_oihw.astype(jnp.float32), (2, 3, 1, 0))  # (3,3,Ci,Co)
    wi = jnp.arange(W)[:, None]
    wo = jnp.arange(W)[None, :]
    kw = wi - wo + 1                                              # (W, W)
    valid = ((kw >= 0) & (kw <= 2)).astype(jnp.float32)
    band = wt[:, jnp.clip(kw, 0, 2)]                              # (3,W,W,Ci,Co)
    band = band * valid[None, :, :, None, None]
    band = jnp.transpose(band, (0, 1, 3, 2, 4))                   # (3,W,Ci,W,Co)
    return band.reshape(3 * W * Cin, W * Cout)


def basic_block(x_nchw, w1_oihw, w2_oihw, g1, b1, g2, b2):
    """Wrapper: NCHW in / NCHW out, matching the PyTorch module (train mode)."""
    N, Cin, H, W = x_nchw.shape
    Cout = w1_oihw.shape[0]
    assert Cin == Cout, "default BasicBlock config: inplanes == planes"
    assert W & (W - 1) == 0, "lane-group BN reduction assumes power-of-two W"
    assert H % 8 == 0, "sublane-aligned im2col window assumes H % 8 == 0"
    L = W * Cin
    assert L % 128 == 0, "lane-dense layout assumes W*C a multiple of 128"

    OFF = 8                  # interior row offset in the scratch (multiple of 8)
    Hs = OFF + H + 8         # scratch rows: covers OFF-1 .. OFF+H, multiple of 8

    # TODO(synk): in a real network, keep activations in (N, H, W*C) layout
    # between stacked blocks and precompute/cache the banded weights once;
    # here the transposes/weight build run per call only for the demo.
    x = jnp.transpose(x_nchw, (0, 2, 3, 1)).astype(jnp.float32).reshape(N, H, L)
    wb1 = _banded_conv_weight(w1_oihw, W)     # (3L, L)
    wb2 = _banded_conv_weight(w2_oihw, W)

    def lanes(v):  # (C,) -> (1, W*C): per-lane gamma/beta (lane l -> v[l % C])
        return jnp.tile(v.astype(jnp.float32), W).reshape(1, L)

    vmem = pl.BlockSpec(memory_space=pltpu.MemorySpace.VMEM)
    out = pl.pallas_call(
        functools.partial(_basic_block_kernel, Cout, OFF),
        out_shape=jax.ShapeDtypeStruct((N, H, L), jnp.float32),
        in_specs=[vmem] * 7,
        out_specs=vmem,
        scratch_shapes=[pltpu.VMEM((N, Hs, 3 * L), jnp.float32)],
        compiler_params=pltpu.CompilerParams(
            vmem_limit_bytes=32 * 1024 * 1024),
    )(x, wb1, wb2, lanes(g1), lanes(b1), lanes(g2), lanes(b2))

    return jnp.transpose(out.reshape(N, H, W, Cout), (0, 3, 1, 2))


def ref_basic_block(x, w1, w2, g1, b1, g2, b2):
    """Pure-JAX reference (same math as the PyTorch module in train mode)."""
    dn = jax.lax.conv_dimension_numbers(x.shape, w1.shape,
                                        ('NCHW', 'OIHW', 'NCHW'))

    def bn(y, g, b):
        mean = jnp.mean(y, axis=(0, 2, 3), keepdims=True)
        var = jnp.mean((y - mean) ** 2, axis=(0, 2, 3), keepdims=True)
        return ((y - mean) / jnp.sqrt(var + EPS)
                * g.reshape(1, -1, 1, 1) + b.reshape(1, -1, 1, 1))

    h = jax.lax.conv_general_dilated(x, w1, (1, 1), ((1, 1), (1, 1)),
                                     dimension_numbers=dn)
    h = jnp.maximum(bn(h, g1, b1), 0.0)
    o = jax.lax.conv_general_dilated(h, w2, (1, 1), ((1, 1), (1, 1)),
                                     dimension_numbers=dn)
    o = bn(o, g2, b2)
    return jnp.maximum(o + x, 0.0)


if __name__ == "__main__":
    N, C, H, W = 2, 8, 16, 16   # inplanes == planes == 8, stride=1, W*C = 128
    key = jax.random.PRNGKey(0)
    kx, kw1, kw2 = jax.random.split(key, 3)

    x = jax.random.normal(kx, (N, C, H, W), jnp.float32)
    # deterministic weight init (stands in for PyTorch's kaiming init)
    w1 = jax.random.normal(kw1, (C, C, 3, 3), jnp.float32) * 0.1
    w2 = jax.random.normal(kw2, (C, C, 3, 3), jnp.float32) * 0.1
    # nn.BatchNorm2d defaults: weight=1, bias=0
    g1 = jnp.ones((C,), jnp.float32)
    b1 = jnp.zeros((C,), jnp.float32)
    g2 = jnp.ones((C,), jnp.float32)
    b2 = jnp.zeros((C,), jnp.float32)

    out = jax.block_until_ready(basic_block(x, w1, w2, g1, b1, g2, b2))

    ref = jax.block_until_ready(ref_basic_block(x, w1, w2, g1, b1, g2, b2))
    np.testing.assert_allclose(np.asarray(out), np.asarray(ref),
                               rtol=1e-4, atol=1e-4)

    print("KERNEL_OK")
</pallas_src>

<mosaic_0001>
module attributes {stable_mosaic.version = 11 : i64} {
  func.func @_basic_block_kernel(%arg0: memref<2x16x128xf32, #tpu.memory_space<vmem>>, %arg1: memref<384x128xf32, #tpu.memory_space<vmem>>, %arg2: memref<384x128xf32, #tpu.memory_space<vmem>>, %arg3: memref<1x128xf32, #tpu.memory_space<vmem>>, %arg4: memref<1x128xf32, #tpu.memory_space<vmem>>, %arg5: memref<1x128xf32, #tpu.memory_space<vmem>>, %arg6: memref<1x128xf32, #tpu.memory_space<vmem>>, %arg7: memref<2x16x128xf32, #tpu.memory_space<vmem>>, %arg8: memref<2x32x384xf32, #tpu.memory_space<vmem>>) attributes {dimension_semantics = [], scalar_prefetch = 0 : i64, scratch_operands = 1 : i64, tpu.core_type = #tpu.core_type<tc>} {
    %cst = arith.constant 0.000000e+00 : f32
    %0 = vector.broadcast %cst : f32 to vector<2x1x128xf32>
    %c0 = arith.constant 0 : index
    %c8 = arith.constant 8 : index
    %c0_0 = arith.constant 0 : index
    %1 = vector.load %arg8[%c0, %c8, %c0_0] : memref<2x32x384xf32, #tpu.memory_space<vmem>>, vector<2x1x128xf32>
    tpu.vector_store %arg8[%c0, %c8, %c0_0], %0 {strides = array<i32>} : memref<2x32x384xf32, #tpu.memory_space<vmem>>, vector<2x1x128xf32>,
    %c0_1 = arith.constant 0 : index
    %c23 = arith.constant 23 : index
    %c256 = arith.constant 256 : index
    %2 = vector.load %arg8[%c0_1, %c23, %c256] : memref<2x32x384xf32, #tpu.memory_space<vmem>>, vector<2x1x128xf32>
    tpu.vector_store %arg8[%c0_1, %c23, %c256], %0 {strides = array<i32>} : memref<2x32x384xf32, #tpu.memory_space<vmem>>, vector<2x1x128xf32>,
    %c0_2 = arith.constant 0 : index
    %c0_3 = arith.constant 0 : index
    %c0_4 = arith.constant 0 : index
    %3 = vector.load %arg0[%c0_2, %c0_3, %c0_4] : memref<2x16x128xf32, #tpu.memory_space<vmem>>, vector<2x16x128xf32>
    %c0_5 = arith.constant 0 : index
    %c9 = arith.constant 9 : index
    %c0_6 = arith.constant 0 : index
    %4 = vector.load %arg8[%c0_5, %c9, %c0_6] : memref<2x32x384xf32, #tpu.memory_space<vmem>>, vector<2x16x128xf32>
    tpu.vector_store %arg8[%c0_5, %c9, %c0_6], %3 {strides = array<i32>} : memref<2x32x384xf32, #tpu.memory_space<vmem>>, vector<2x16x128xf32>,
    %c0_7 = arith.constant 0 : index
    %c8_8 = arith.constant 8 : index
    %c128 = arith.constant 128 : index
    %5 = vector.load %arg8[%c0_7, %c8_8, %c128] : memref<2x32x384xf32, #tpu.memory_space<vmem>>, vector<2x16x128xf32>
    tpu.vector_store %arg8[%c0_7, %c8_8, %c128], %3 {strides = array<i32>} : memref<2x32x384xf32, #tpu.memory_space<vmem>>, vector<2x16x128xf32>,
    %c0_9 = arith.constant 0 : index
    %c7 = arith.constant 7 : index
    %c256_10 = arith.constant 256 : index
    %6 = vector.load %arg8[%c0_9, %c7, %c256_10] : memref<2x32x384xf32, #tpu.memory_space<vmem>>, vector<2x16x128xf32>
    tpu.vector_store %arg8[%c0_9, %c7, %c256_10], %3 {strides = array<i32>} : memref<2x32x384xf32, #tpu.memory_space<vmem>>, vector<2x16x128xf32>,
    %c0_11 = arith.constant 0 : index
    %c8_12 = arith.constant 8 : index
    %c0_13 = arith.constant 0 : index
    %7 = vector.load %arg8[%c0_11, %c8_12, %c0_13] : memref<2x32x384xf32, #tpu.memory_space<vmem>>, vector<2x16x384xf32>
    %8 = vector.shape_cast %7 : vector<2x16x384xf32> to vector<32x384xf32>
    %c0_14 = arith.constant 0 : index
    %c0_15 = arith.constant 0 : index
    %9 = vector.load %arg1[%c0_14, %c0_15] : memref<384x128xf32, #tpu.memory_space<vmem>>, vector<384x128xf32>
    %cst_16 = arith.constant dense<0.000000e+00> : vector<32x128xf32>
    %10 = tpu.matmul %8, %9, %cst_16 {dimension_numbers = #tpu.dot_dimension_numbers<[1], [0], [0], [1], [0, 0, 1, 1], [], []>} : vector<32x384xf32>, vector<384x128xf32>, vector<32x128xf32> -> vector<32x128xf32>
    %c0_17 = arith.constant 0 : index
    %c0_18 = arith.constant 0 : index
    %11 = vector.load %arg3[%c0_17, %c0_18] : memref<1x128xf32, #tpu.memory_space<vmem>>, vector<1x128xf32>
    %c0_19 = arith.constant 0 : index
    %c0_20 = arith.constant 0 : index
    %12 = vector.load %arg4[%c0_19, %c0_20] : memref<1x128xf32, #tpu.memory_space<vmem>>, vector<1x128xf32>
    %cst_21 = arith.constant dense<0.000000e+00> : vector<128xf32>
    %13 = vector.multi_reduction <add>, %10, %cst_21 [0] : vector<32x128xf32> to vector<128xf32>
    %14 = vector.shape_cast %13 : vector<128xf32> to vector<1x128xf32>
    %15 = arith.mulf %10, %10 : vector<32x128xf32>
    %cst_22 = arith.constant dense<0.000000e+00> : vector<128xf32>
    %16 = vector.multi_reduction <add>, %15, %cst_22 [0] : vector<32x128xf32> to vector<128xf32>
    %17 = vector.shape_cast %16 : vector<128xf32> to vector<1x128xf32>
    %c8_i32 = arith.constant 8 : i32
    %18 = tpu.dynamic_rotate %14 by %c8_i32 dim 1 : vector<1x128xf32>, i32 -> vector<1x128xf32>
    %19 = arith.addf %14, %18 : vector<1x128xf32>
    %c8_i32_23 = arith.constant 8 : i32
    %20 = tpu.dynamic_rotate %17 by %c8_i32_23 dim 1 : vector<1x128xf32>, i32 -> vector<1x128xf32>
    %21 = arith.addf %17, %20 : vector<1x128xf32>
    %c16_i32 = arith.constant 16 : i32
    %22 = tpu.dynamic_rotate %19 by %c16_i32 dim 1 : vector<1x128xf32>, i32 -> vector<1x128xf32>
    %23 = arith.addf %19, %22 : vector<1x128xf32>
    %c16_i32_24 = arith.constant 16 : i32
    %24 = tpu.dynamic_rotate %21 by %c16_i32_24 dim 1 : vector<1x128xf32>, i32 -> vector<1x128xf32>
    %25 = arith.addf %21, %24 : vector<1x128xf32>
    %c32_i32 = arith.constant 32 : i32
    %26 = tpu.dynamic_rotate %23 by %c32_i32 dim 1 : vector<1x128xf32>, i32 -> vector<1x128xf32>
    %27 = arith.addf %23, %26 : vector<1x128xf32>
    %c32_i32_25 = arith.constant 32 : i32
    %28 = tpu.dynamic_rotate %25 by %c32_i32_25 dim 1 : vector<1x128xf32>, i32 -> vector<1x128xf32>
    %29 = arith.addf %25, %28 : vector<1x128xf32>
    %c64_i32 = arith.constant 64 : i32
    %30 = tpu.dynamic_rotate %27 by %c64_i32 dim 1 : vector<1x128xf32>, i32 -> vector<1x128xf32>
    %31 = arith.addf %27, %30 : vector<1x128xf32>
    %c64_i32_26 = arith.constant 64 : i32
    %32 = tpu.dynamic_rotate %29 by %c64_i32_26 dim 1 : vector<1x128xf32>, i32 -> vector<1x128xf32>
    %33 = arith.addf %29, %32 : vector<1x128xf32>
    %cst_27 = arith.constant 0.001953125 : f32
    %34 = vector.broadcast %cst_27 : f32 to vector<1x128xf32>
    %35 = arith.mulf %31, %34 : vector<1x128xf32>
    %cst_28 = arith.constant 0.001953125 : f32
    %36 = vector.broadcast %cst_28 : f32 to vector<1x128xf32>
    %37 = arith.mulf %33, %36 : vector<1x128xf32>
    %38 = arith.mulf %35, %35 : vector<1x128xf32>
    %39 = arith.subf %37, %38 : vector<1x128xf32>
    %cst_29 = arith.constant 0.000000e+00 : f32
    %40 = vector.broadcast %cst_29 : f32 to vector<1x128xf32>
    %41 = arith.maximumf %39, %40 : vector<1x128xf32>
    %cst_30 = arith.constant 9.99999974E-6 : f32
    %42 = vector.broadcast %cst_30 : f32 to vector<1x128xf32>
    %43 = arith.addf %41, %42 : vector<1x128xf32>
    %44 = math.rsqrt %43 : vector<1x128xf32>
    %45 = arith.mulf %11, %44 : vector<1x128xf32>
    %46 = arith.mulf %35, %45 : vector<1x128xf32>
    %47 = arith.subf %12, %46 : vector<1x128xf32>
    %48 = vector.broadcast %45 : vector<1x128xf32> to vector<32x128xf32>
    %49 = arith.mulf %10, %48 : vector<32x128xf32>
    %50 = vector.broadcast %47 : vector<1x128xf32> to vector<32x128xf32>
    %51 = arith.addf %49, %50 : vector<32x128xf32>
    %cst_31 = arith.constant 0.000000e+00 : f32
    %52 = vector.broadcast %cst_31 : f32 to vector<32x128xf32>
    %53 = arith.maximumf %51, %52 : vector<32x128xf32>
    %54 = vector.shape_cast %53 : vector<32x128xf32> to vector<2x16x128xf32>
    %c0_32 = arith.constant 0 : index
    %c9_33 = arith.constant 9 : index
    %c0_34 = arith.constant 0 : index
    %55 = vector.load %arg8[%c0_32, %c9_33, %c0_34] : memref<2x32x384xf32, #tpu.memory_space<vmem>>, vector<2x16x128xf32>
    tpu.vector_store %arg8[%c0_32, %c9_33, %c0_34], %54 {strides = array<i32>} : memref<2x32x384xf32, #tpu.memory_space<vmem>>, vector<2x16x128xf32>,
    %c0_35 = arith.constant 0 : index
    %c8_36 = arith.constant 8 : index
    %c128_37 = arith.constant 128 : index
    %56 = vector.load %arg8[%c0_35, %c8_36, %c128_37] : memref<2x32x384xf32, #tpu.memory_space<vmem>>, vector<2x16x128xf32>
    tpu.vector_store %arg8[%c0_35, %c8_36, %c128_37], %54 {strides = array<i32>} : memref<2x32x384xf32, #tpu.memory_space<vmem>>, vector<2x16x128xf32>,
    %c0_38 = arith.constant 0 : index
    %c7_39 = arith.constant 7 : index
    %c256_40 = arith.constant 256 : index
    %57 = vector.load %arg8[%c0_38, %c7_39, %c256_40] : memref<2x32x384xf32, #tpu.memory_space<vmem>>, vector<2x16x128xf32>
    tpu.vector_store %arg8[%c0_38, %c7_39, %c256_40], %54 {strides = array<i32>} : memref<2x32x384xf32, #tpu.memory_space<vmem>>, vector<2x16x128xf32>,
    %c0_41 = arith.constant 0 : index
    %c8_42 = arith.constant 8 : index
    %c0_43 = arith.constant 0 : index
    %58 = vector.load %arg8[%c0_41, %c8_42, %c0_43] : memref<2x32x384xf32, #tpu.memory_space<vmem>>, vector<2x16x384xf32>
    %59 = vector.shape_cast %58 : vector<2x16x384xf32> to vector<32x384xf32>
    %c0_44 = arith.constant 0 : index
    %c0_45 = arith.constant 0 : index
    %60 = vector.load %arg2[%c0_44, %c0_45] : memref<384x128xf32, #tpu.memory_space<vmem>>, vector<384x128xf32>
    %cst_46 = arith.constant dense<0.000000e+00> : vector<32x128xf32>
    %61 = tpu.matmul %59, %60, %cst_46 {dimension_numbers = #tpu.dot_dimension_numbers<[1], [0], [0], [1], [0, 0, 1, 1], [], []>} : vector<32x384xf32>, vector<384x128xf32>, vector<32x128xf32> -> vector<32x128xf32>
    %c0_47 = arith.constant 0 : index
    %c0_48 = arith.constant 0 : index
    %62 = vector.load %arg5[%c0_47, %c0_48] : memref<1x128xf32, #tpu.memory_space<vmem>>, vector<1x128xf32>
    %c0_49 = arith.constant 0 : index
    %c0_50 = arith.constant 0 : index
    %63 = vector.load %arg6[%c0_49, %c0_50] : memref<1x128xf32, #tpu.memory_space<vmem>>, vector<1x128xf32>
    %cst_51 = arith.constant dense<0.000000e+00> : vector<128xf32>
    %64 = vector.multi_reduction <add>, %61, %cst_51 [0] : vector<32x128xf32> to vector<128xf32>
    %65 = vector.shape_cast %64 : vector<128xf32> to vector<1x128xf32>
    %66 = arith.mulf %61, %61 : vector<32x128xf32>
    %cst_52 = arith.constant dense<0.000000e+00> : vector<128xf32>
    %67 = vector.multi_reduction <add>, %66, %cst_52 [0] : vector<32x128xf32> to vector<128xf32>
    %68 = vector.shape_cast %67 : vector<128xf32> to vector<1x128xf32>
    %c8_i32_53 = arith.constant 8 : i32
    %69 = tpu.dynamic_rotate %65 by %c8_i32_53 dim 1 : vector<1x128xf32>, i32 -> vector<1x128xf32>
    %70 = arith.addf %65, %69 : vector<1x128xf32>
    %c8_i32_54 = arith.constant 8 : i32
    %71 = tpu.dynamic_rotate %68 by %c8_i32_54 dim 1 : vector<1x128xf32>, i32 -> vector<1x128xf32>
    %72 = arith.addf %68, %71 : vector<1x128xf32>
    %c16_i32_55 = arith.constant 16 : i32
    %73 = tpu.dynamic_rotate %70 by %c16_i32_55 dim 1 : vector<1x128xf32>, i32 -> vector<1x128xf32>
    %74 = arith.addf %70, %73 : vector<1x128xf32>
    %c16_i32_56 = arith.constant 16 : i32
    %75 = tpu.dynamic_rotate %72 by %c16_i32_56 dim 1 : vector<1x128xf32>, i32 -> vector<1x128xf32>
    %76 = arith.addf %72, %75 : vector<1x128xf32>
    %c32_i32_57 = arith.constant 32 : i32
    %77 = tpu.dynamic_rotate %74 by %c32_i32_57 dim 1 : vector<1x128xf32>, i32 -> vector<1x128xf32>
    %78 = arith.addf %74, %77 : vector<1x128xf32>
    %c32_i32_58 = arith.constant 32 : i32
    %79 = tpu.dynamic_rotate %76 by %c32_i32_58 dim 1 : vector<1x128xf32>, i32 -> vector<1x128xf32>
    %80 = arith.addf %76, %79 : vector<1x128xf32>
    %c64_i32_59 = arith.constant 64 : i32
    %81 = tpu.dynamic_rotate %78 by %c64_i32_59 dim 1 : vector<1x128xf32>, i32 -> vector<1x128xf32>
    %82 = arith.addf %78, %81 : vector<1x128xf32>
    %c64_i32_60 = arith.constant 64 : i32
    %83 = tpu.dynamic_rotate %80 by %c64_i32_60 dim 1 : vector<1x128xf32>, i32 -> vector<1x128xf32>
    %84 = arith.addf %80, %83 : vector<1x128xf32>
    %cst_61 = arith.constant 0.001953125 : f32
    %85 = vector.broadcast %cst_61 : f32 to vector<1x128xf32>
    %86 = arith.mulf %82, %85 : vector<1x128xf32>
    %cst_62 = arith.constant 0.001953125 : f32
    %87 = vector.broadcast %cst_62 : f32 to vector<1x128xf32>
    %88 = arith.mulf %84, %87 : vector<1x128xf32>
    %89 = arith.mulf %86, %86 : vector<1x128xf32>
    %90 = arith.subf %88, %89 : vector<1x128xf32>
    %cst_63 = arith.constant 0.000000e+00 : f32
    %91 = vector.broadcast %cst_63 : f32 to vector<1x128xf32>
    %92 = arith.maximumf %90, %91 : vector<1x128xf32>
    %cst_64 = arith.constant 9.99999974E-6 : f32
    %93 = vector.broadcast %cst_64 : f32 to vector<1x128xf32>
    %94 = arith.addf %92, %93 : vector<1x128xf32>
    %95 = math.rsqrt %94 : vector<1x128xf32>
    %96 = arith.mulf %62, %95 : vector<1x128xf32>
    %97 = arith.mulf %86, %96 : vector<1x128xf32>
    %98 = arith.subf %63, %97 : vector<1x128xf32>
    %99 = vector.broadcast %96 : vector<1x128xf32> to vector<32x128xf32>
    %100 = arith.mulf %61, %99 : vector<32x128xf32>
    %101 = vector.broadcast %98 : vector<1x128xf32> to vector<32x128xf32>
    %102 = arith.addf %100, %101 : vector<32x128xf32>
    %103 = vector.shape_cast %3 : vector<2x16x128xf32> to vector<32x128xf32>
    %104 = arith.addf %102, %103 : vector<32x128xf32>
    %cst_65 = arith.constant 0.000000e+00 : f32
    %105 = vector.broadcast %cst_65 : f32 to vector<32x128xf32>
    %106 = arith.maximumf %104, %105 : vector<32x128xf32>
    %107 = vector.shape_cast %106 : vector<32x128xf32> to vector<2x16x128xf32>
    %c0_66 = arith.constant 0 : index
    %c0_67 = arith.constant 0 : index
    %c0_68 = arith.constant 0 : index
    %108 = vector.load %arg7[%c0_66, %c0_67, %c0_68] : memref<2x16x128xf32, #tpu.memory_space<vmem>>, vector<2x16x128xf32>
    tpu.vector_store %arg7[%c0_66, %c0_67, %c0_68], %107 {strides = array<i32>} : memref<2x16x128xf32, #tpu.memory_space<vmem>>, vector<2x16x128xf32>,
    return
  }
}

</mosaic_0001>

<llo_original>
// kernel: tpu_custom_call.1
$region0: #{tpu_custom_call.1}
  #allocation0 [shape = 'u32[]', space=smem, size = 0x4, offset = 0x4, fixed_abs, tag = 'smem constant byte address 0x4 - core index']
  #allocation1 [shape = 'u32[72,128]{1,0:T(1,128)}', space=vmem, size = 0x9000, scoped, tag = 'internal scratch']
  #allocation2 [shape = 'f32[2,32,384]{2,1,0:T(8,128)}', space=vmem, size = 0x18000, scoped, tag = 'scratch operand']
  %s0 = inlined_call_operand.hbm [shape: f32[2,16,128], index: 0, kind: input, shape index: {}]
  %s1 = inlined_call_operand.hbm [shape: f32[384,128], index: 1, kind: input, shape index: {}]
  %s2 = inlined_call_operand.hbm [shape: f32[384,128], index: 2, kind: input, shape index: {}]
  %s3 = inlined_call_operand.vmem [shape: f32[1,128], index: 3, kind: input, shape index: {}]
  %s4 = inlined_call_operand.vmem [shape: f32[1,128], index: 4, kind: input, shape index: {}]
  %s5 = inlined_call_operand.vmem [shape: f32[1,128], index: 5, kind: input, shape index: {}]
  %s6 = inlined_call_operand.vmem [shape: f32[1,128], index: 6, kind: input, shape index: {}]
  %s7 = inlined_call_operand.hbm [shape: f32[2,16,128], index: 7, kind: output, shape index: {}]
  %s8 = sld [smem:[#allocation0]]
  $region50: #{tpu_custom_call.1} parent=0
    _
  %s10 = ssub.s32 1, %s8
  %s11 = scalar_select 0, %s10, %s8
  $region1: #{tpu_custom_call.1} parent=0
    #allocation3 [shape = 'u8[16384]{0}', space=vmem, size = 0x4000, scoped, tag = 'input window, operand 0, single buffered']
    #allocation4 [shape = 's32[1]{0}', space=sflag, size = 0x4, scoped, tag = 'scoped memory for tpu_custom_call.1']
    #allocation5 [shape = 's32[1]{0}', space=sflag, size = 0x4, scoped, tag = 'scoped memory for tpu_custom_call.1']
    #allocation6 [shape = 'u8[196608]{0}', space=vmem, size = 0x30000, scoped, tag = 'input window, operand 1, single buffered']
    #allocation7 [shape = 's32[1]{0}', space=sflag, size = 0x4, scoped, tag = 'scoped memory for tpu_custom_call.1']
    #allocation8 [shape = 'u8[196608]{0}', space=vmem, size = 0x30000, scoped, tag = 'input window, operand 2, single buffered']
    #allocation9 [shape = 'u8[16384]{0}', space=vmem, size = 0x4000, scoped, tag = 'output window, operand 0, single buffered']
    %12 = vsyncpa [#allocation4], 0
    %13 = vsyncpa [#allocation7], 0
    %14 = vsyncpa [#allocation5], 0
    // Predicated region
    $region2: #{tpu_custom_call.1} parent=1 // pred_check
      _
    $region3: #{tpu_custom_call.1} parent=1 // pred_check_branch
      %16 = sbr.rel (0) target = $region5
    $region4: #{tpu_custom_call.1} parent=1 // pred_region
      %18 = vsyncadd [#allocation4], 0
      %s19 = sshll.u32 %s0, 4
      %s20 = int_to_ptr.hbm [resolvable:$true] %s19
      %s21 = sshll.u32 [#allocation3], 4
      %s22 = int_to_ptr.vmem [resolvable:$true] %s21
      %27 = dma.hbm_to_vmem [thread:$0]  %s20, 512, %s22, [#allocation4], 128, 128, 8
    $region5: #{tpu_custom_call.1} parent=1 // pred_fallthru
      _
    // Predicated region
    $region6: #{tpu_custom_call.1} parent=1 // pred_check
      _
    $region7: #{tpu_custom_call.1} parent=1 // pred_check_branch
      %29 = sbr.rel (0) target = $region9
    $region8: #{tpu_custom_call.1} parent=1 // pred_region
      %31 = vsyncadd [#allocation7], 0
      %s32 = sshll.u32 %s1, 4
      %s33 = int_to_ptr.hbm [resolvable:$true] %s32
      %s34 = sshll.u32 [#allocation6], 4
      %s35 = int_to_ptr.vmem [resolvable:$true] %s34
      %40 = dma.hbm_to_vmem [thread:$0]  %s33, 6144, %s35, [#allocation7], 128, 128, 8
    $region9: #{tpu_custom_call.1} parent=1 // pred_fallthru
      _
    // Predicated region
    $region10: #{tpu_custom_call.1} parent=1 // pred_check
      _
    $region11: #{tpu_custom_call.1} parent=1 // pred_check_branch
      %42 = sbr.rel (0) target = $region13
    $region12: #{tpu_custom_call.1} parent=1 // pred_region
      %44 = vsyncadd [#allocation7], 0
      %s45 = sshll.u32 %s2, 4
      %s46 = int_to_ptr.hbm [resolvable:$true] %s45
      %s47 = sshll.u32 [#allocation8], 4
      %s48 = int_to_ptr.vmem [resolvable:$true] %s47
      %53 = dma.hbm_to_vmem [thread:$0]  %s46, 6144, %s48, [#allocation7], 128, 128, 8
    $region13: #{tpu_custom_call.1} parent=1 // pred_fallthru
      _
    // Predicated region
    $region14: #{tpu_custom_call.1} parent=1 // pred_check
      _
    $region15: #{tpu_custom_call.1} parent=1 // pred_check_branch
      %55 = sbr.rel (0) target = $region17
    $region16: #{tpu_custom_call.1} parent=1 // pred_region
      _
    $region17: #{tpu_custom_call.1} parent=1 // pred_fallthru
      _
    // Predicated region
    $region18: #{tpu_custom_call.1} parent=1 // pred_check
      _
    $region19: #{tpu_custom_call.1} parent=1 // pred_check_branch
      %57 = sbr.rel (0) target = $region21
    $region20: #{tpu_custom_call.1} parent=1 // pred_region
      _
    $region21: #{tpu_custom_call.1} parent=1 // pred_fallthru
      _
    // Predicated region
    $region22: #{tpu_custom_call.1} parent=1 // pred_check
      _
    $region23: #{tpu_custom_call.1} parent=1 // pred_check_branch
      %59 = sbr.rel (0) target = $region25
    $region24: #{tpu_custom_call.1} parent=1 // pred_region
      _
    $region25: #{tpu_custom_call.1} parent=1 // pred_fallthru
      _
    // Predicated region
    $region26: #{tpu_custom_call.1} parent=1 // pred_check
      _
    $region27: #{tpu_custom_call.1} parent=1 // pred_check_branch
      %61 = sbr.rel (0) target = $region29
    $region28: #{tpu_custom_call.1} parent=1 // pred_region
      _
    $region29: #{tpu_custom_call.1} parent=1 // pred_fallthru
      _
    // Predicated region
    $region30: #{tpu_custom_call.1} parent=1 // pred_check
      _
    $region31: #{tpu_custom_call.1} parent=1 // pred_check_branch
      %63 = sbr.rel (0) target = $region33
    $region32: #{tpu_custom_call.1} parent=1 // pred_region
      %65 = dma.done [#allocation4], 512
    $region33: #{tpu_custom_call.1} parent=1 // pred_fallthru
      _
    // Predicated region
    $region34: #{tpu_custom_call.1} parent=1 // pred_check
      _
    $region35: #{tpu_custom_call.1} parent=1 // pred_check_branch
      %67 = sbr.rel (0) target = $region37
    $region36: #{tpu_custom_call.1} parent=1 // pred_region
      %69 = dma.done [#allocation7], 6144
    $region37: #{tpu_custom_call.1} parent=1 // pred_fallthru
      _
    // Predicated region
    $region38: #{tpu_custom_call.1} parent=1 // pred_check
      _
    $region39: #{tpu_custom_call.1} parent=1 // pred_check_branch
      %71 = sbr.rel (0) target = $region41
    $region40: #{tpu_custom_call.1} parent=1 // pred_region
      %73 = dma.done [#allocation7], 6144
    $region41: #{tpu_custom_call.1} parent=1 // pred_fallthru
      _
    %74 = vst [vmem:[#allocation2 + $0x18] sm:$0x1] 0.0
    %75 = vst [vmem:[#allocation2 + $0x78] sm:$0x1] 0.0
    %76 = vst [vmem:[#allocation2 + $0x47] sm:$0x1] 0.0
    %77 = vst [vmem:[#allocation2 + $0xa7] sm:$0x1] 0.0
    %v78 = vld [vmem:[#allocation3] sm:$0xff]
    %v79 = vld [vmem:[#allocation3 + $0x8] sm:$0xff]
    %v80 = vld [vmem:[#allocation3 + $0x10] sm:$0xff]
    %v81 = vld [vmem:[#allocation3 + $0x18] sm:$0xff]
    %vm86 = vcmask 1040384
    %v87 = vrot.slane %v78, 7
    %v88 = vrot.slane %v79, 7
    %v89 = vsel %vm86, %v87, %v88
    %v90 = vrot.slane %v80, 7
    %v91 = vrot.slane %v81, 7
    %v92 = vsel %vm86, %v90, %v91
    %99 = vst [vmem:[#allocation2 + $0x18] sm:$0xfe] %v87
    %100 = vst [vmem:[#allocation2 + $0x30] sm:$0xff] %v89
    %101 = vst [vmem:[#allocation2 + $0x48] sm:$0x1] %v88
    %102 = vst [vmem:[#allocation2 + $0x78] sm:$0xfe] %v90
    %103 = vst [vmem:[#allocation2 + $0x90] sm:$0xff] %v92
    %104 = vst [vmem:[#allocation2 + $0xa8] sm:$0x1] %v91
    %105 = vst [vmem:[#allocation2 + $0x20] sm:$0xff] %v78
    %106 = vst [vmem:[#allocation2 + $0x38] sm:$0xff] %v79
    %107 = vst [vmem:[#allocation2 + $0x80] sm:$0xff] %v80
    %108 = vst [vmem:[#allocation2 + $0x98] sm:$0xff] %v81
    %vm109 = vcmask 1046528
    %v110 = vrot.slane %v78, 1
    %v111 = vrot.slane %v79, 1
    %v112 = vsel %vm109, %v110, %v111
    %v113 = vrot.slane %v80, 1
    %v114 = vrot.slane %v81, 1
    %v115 = vsel %vm109, %v113, %v114
    %122 = vst [vmem:[#allocation2 + $0x10] sm:$0x80] %v110
    %123 = vst [vmem:[#allocation2 + $0x28] sm:$0xff] %v112
    %124 = vst [vmem:[#allocation2 + $0x40] sm:$0x7f] %v111
    %125 = vst [vmem:[#allocation2 + $0x70] sm:$0x80] %v113
    %126 = vst [vmem:[#allocation2 + $0x88] sm:$0xff] %v115
    %127 = vst [vmem:[#allocation2 + $0xa0] sm:$0x7f] %v114
    %v128 = vld [vmem:[#allocation2 + $0x18] sm:$0xff]
    %v129 = vld [vmem:[#allocation2 + $0x20] sm:$0xff]
    %v130 = vld [vmem:[#allocation2 + $0x28] sm:$0xff]
    %v131 = vld [vmem:[#allocation2 + $0x30] sm:$0xff]
    %v132 = vld [vmem:[#allocation2 + $0x38] sm:$0xff]
    %v133 = vld [vmem:[#allocation2 + $0x40] sm:$0xff]
    %v134 = vld [vmem:[#allocation2 + $0x78] sm:$0xff]
    %v135 = vld [vmem:[#allocation2 + $0x80] sm:$0xff]
    %v136 = vld [vmem:[#allocation2 + $0x88] sm:$0xff]
    %v137 = vld [vmem:[#allocation2 + $0x90] sm:$0xff]
    %v138 = vld [vmem:[#allocation2 + $0x98] sm:$0xff]
    %v139 = vld [vmem:[#allocation2 + $0xa0] sm:$0xff]
    %v140 = vld [vmem:[#allocation6] sm:$0xff]
    %v141 = vld [vmem:[#allocation6 + $0x8] sm:$0xff]
    %v142 = vld [vmem:[#allocation6 + $0x10] sm:$0xff]
    %v143 = vld [vmem:[#allocation6 + $0x18] sm:$0xff]
    %v144 = vld [vmem:[#allocation6 + $0x20] sm:$0xff]
    %v145 = vld [vmem:[#allocation6 + $0x28] sm:$0xff]
    %v146 = vld [vmem:[#allocation6 + $0x30] sm:$0xff]
    %v147 = vld [vmem:[#allocation6 + $0x38] sm:$0xff]
    %v148 = vld [vmem:[#allocation6 + $0x40] sm:$0xff]
    %v149 = vld [vmem:[#allocation6 + $0x48] sm:$0xff]
    %v150 = vld [vmem:[#allocation6 + $0x50] sm:$0xff]
    %v151 = vld [vmem:[#allocation6 + $0x58] sm:$0xff]
    %v152 = vld [vmem:[#allocation6 + $0x60] sm:$0xff]
    %v153 = vld [vmem:[#allocation6 + $0x68] sm:$0xff]
    %v154 = vld [vmem:[#allocation6 + $0x70] sm:$0xff]
    %v155 = vld [vmem:[#allocation6 + $0x78] sm:$0xff]
    %v156 = vld [vmem:[#allocation6 + $0x80] sm:$0xff]
    %v157 = vld [vmem:[#allocation6 + $0x88] sm:$0xff]
    %v158 = vld [vmem:[#allocation6 + $0x90] sm:$0xff]
    %v159 = vld [vmem:[#allocation6 + $0x98] sm:$0xff]
    %v160 = vld [vmem:[#allocation6 + $0xa0] sm:$0xff]
    %v161 = vld [vmem:[#allocation6 + $0xa8] sm:$0xff]
    %v162 = vld [vmem:[#allocation6 + $0xb0] sm:$0xff]
    %v163 = vld [vmem:[#allocation6 + $0xb8] sm:$0xff]
    %v164 = vld [vmem:[#allocation6 + $0xc0] sm:$0xff]
    %v165 = vld [vmem:[#allocation6 + $0xc8] sm:$0xff]
    %v166 = vld [vmem:[#allocation6 + $0xd0] sm:$0xff]
    %v167 = vld [vmem:[#allocation6 + $0xd8] sm:$0xff]
    %v168 = vld [vmem:[#allocation6 + $0xe0] sm:$0xff]
    %v169 = vld [vmem:[#allocation6 + $0xe8] sm:$0xff]
    %v170 = vld [vmem:[#allocation6 + $0xf0] sm:$0xff]
    %v171 = vld [vmem:[#allocation6 + $0xf8] sm:$0xff]
    %v172 = vld [vmem:[#allocation6 + $0x100] sm:$0xff]
    %v173 = vld [vmem:[#allocation6 + $0x108] sm:$0xff]
    %v174 = vld [vmem:[#allocation6 + $0x110] sm:$0xff]
    %v175 = vld [vmem:[#allocation6 + $0x118] sm:$0xff]
    %v176 = vld [vmem:[#allocation6 + $0x120] sm:$0xff]
    %v177 = vld [vmem:[#allocation6 + $0x128] sm:$0xff]
    %v178 = vld [vmem:[#allocation6 + $0x130] sm:$0xff]
    %v179 = vld [vmem:[#allocation6 + $0x138] sm:$0xff]
    %v180 = vld [vmem:[#allocation6 + $0x140] sm:$0xff]
    %v181 = vld [vmem:[#allocation6 + $0x148] sm:$0xff]
    %v182 = vld [vmem:[#allocation6 + $0x150] sm:$0xff]
    %v183 = vld [vmem:[#allocation6 + $0x158] sm:$0xff]
    %v184 = vld [vmem:[#allocation6 + $0x160] sm:$0xff]
    %v185 = vld [vmem:[#allocation6 + $0x168] sm:$0xff]
    %v186 = vld [vmem:[#allocation6 + $0x170] sm:$0xff]
    %v187 = vld [vmem:[#allocation6 + $0x178] sm:$0xff]
    %188 = vmatpush.msra.mxu0 %v155
    %189 = vmatpush.msra.mxu0 %v154
    %190 = vmatpush.msra.mxu0 %v153
    %191 = vmatpush.msra.mxu0 %v152
    %192 = vmatpush.msra.mxu0 %v151
    %193 = vmatpush.msra.mxu0 %v150
    %194 = vmatpush.msra.mxu0 %v149
    %195 = vmatpush.msra.mxu0 %v148
    %196 = vmatpush.msra.mxu0 %v147
    %197 = vmatpush.msra.mxu0 %v146
    %198 = vmatpush.msra.mxu0 %v145
    %199 = vmatpush.msra.mxu0 %v144
    %200 = vmatpush.msra.mxu0 %v143
    %201 = vmatpush.msra.mxu0 %v142
    %202 = vmatpush.msra.mxu0 %v141
    %203 = vmatpush.msra.mxu0 %v140
    %204 = vmatmul.f32.gmra.mxu0 %v128
    %v205 = vpop.f32.mrf.mxu0
    %v206 = vadd.f32 0.0, %v205
    %207 = vmatmul.f32.gmra.mxu0 %v131
    %v208 = vpop.f32.mrf.mxu0
    %v209 = vadd.f32 0.0, %v208
    %210 = vmatmul.f32.gmra.mxu0 %v134
    %v211 = vpop.f32.mrf.mxu0
    %v212 = vadd.f32 0.0, %v211
    %213 = vmatmul.f32.gmra.mxu0 %v137
    %v214 = vpop.f32.mrf.mxu0
    %v215 = vadd.f32 0.0, %v214
    %216 = vdwg.mxu0
    %217 = vmatpush.msra.mxu0 %v171
    %218 = vmatpush.msra.mxu0 %v170
    %219 = vmatpush.msra.mxu0 %v169
    %220 = vmatpush.msra.mxu0 %v168
    %221 = vmatpush.msra.mxu0 %v167
    %222 = vmatpush.msra.mxu0 %v166
    %223 = vmatpush.msra.mxu0 %v165
    %224 = vmatpush.msra.mxu0 %v164
    %225 = vmatpush.msra.mxu0 %v163
    %226 = vmatpush.msra.mxu0 %v162
    %227 = vmatpush.msra.mxu0 %v161
    %228 = vmatpush.msra.mxu0 %v160
    %229 = vmatpush.msra.mxu0 %v159
    %230 = vmatpush.msra.mxu0 %v158
    %231 = vmatpush.msra.mxu0 %v157
    %232 = vmatpush.msra.mxu0 %v156
    %233 = vmatmul.f32.gmra.mxu0 %v129
    %v234 = vpop.f32.mrf.mxu0
    %v235 = vadd.f32 %v206, %v234
    %236 = vmatmul.f32.gmra.mxu0 %v132
    %v237 = vpop.f32.mrf.mxu0
    %v238 = vadd.f32 %v209, %v237
    %239 = vmatmul.f32.gmra.mxu0 %v135
    %v240 = vpop.f32.mrf.mxu0
    %v241 = vadd.f32 %v212, %v240
    %242 = vmatmul.f32.gmra.mxu0 %v138
    %v243 = vpop.f32.mrf.mxu0
    %v244 = vadd.f32 %v215, %v243
    %245 = vdwg.mxu0
    %246 = vmatpush.msra.mxu0 %v187
    %247 = vmatpush.msra.mxu0 %v186
    %248 = vmatpush.msra.mxu0 %v185
    %249 = vmatpush.msra.mxu0 %v184
    %250 = vmatpush.msra.mxu0 %v183
    %251 = vmatpush.msra.mxu0 %v182
    %252 = vmatpush.msra.mxu0 %v181
    %253 = vmatpush.msra.mxu0 %v180
    %254 = vmatpush.msra.mxu0 %v179
    %255 = vmatpush.msra.mxu0 %v178
    %256 = vmatpush.msra.mxu0 %v177
    %257 = vmatpush.msra.mxu0 %v176
    %258 = vmatpush.msra.mxu0 %v175
    %259 = vmatpush.msra.mxu0 %v174
    %260 = vmatpush.msra.mxu0 %v173
    %261 = vmatpush.msra.mxu0 %v172
    %262 = vmatmul.f32.gmra.mxu0 %v130
    %v263 = vpop.f32.mrf.mxu0
    %v264 = vadd.f32 %v235, %v263
    %265 = vmatmul.f32.gmra.mxu0 %v133
    %v266 = vpop.f32.mrf.mxu0
    %v267 = vadd.f32 %v238, %v266
    %268 = vmatmul.f32.gmra.mxu0 %v136
    %v269 = vpop.f32.mrf.mxu0
    %v270 = vadd.f32 %v241, %v269
    %271 = vmatmul.f32.gmra.mxu0 %v139
    %v272 = vpop.f32.mrf.mxu0
    %v273 = vadd.f32 %v244, %v272
    %274 = vdwg.mxu0
    %v275 = vld [vmem:[%s3] sm:$0x1]
    %v276 = vld [vmem:[%s4] sm:$0x1]
    %v277 = vadd.f32 %v264, %v267
    %v278 = vadd.f32 %v277, %v270
    %v279 = vadd.f32 %v278, %v273
    %v280 = vrot.slane %v279, 4
    %v281 = vadd.f32 %v279, %v280
    %v282 = vrot.slane %v281, 2
    %v283 = vadd.f32 %v281, %v282
    %v284 = vrot.slane %v283, 1
    %v285 = vadd.f32 %v283, %v284
    %v286 = vmul.f32 %v264, %v264
    %v287 = vmul.f32 %v267, %v267
    %v288 = vmul.f32 %v270, %v270
    %v289 = vmul.f32 %v273, %v273
    %v290 = vadd.f32 %v286, %v287
    %v291 = vadd.f32 %v290, %v288
    %v292 = vadd.f32 %v291, %v289
    %v293 = vrot.slane %v292, 4
    %v294 = vadd.f32 %v292, %v293
    %v295 = vrot.slane %v294, 2
    %v296 = vadd.f32 %v294, %v295
    %v297 = vrot.slane %v296, 1
    %v298 = vadd.f32 %v296, %v297
    %299 = vrot.lane.b32.xlu0 %v285, 8
    %v300 = vpop.permute.xlu0 %299
    %v301 = vadd.f32 %v285, %v300
    %302 = vrot.lane.b32.xlu0 %v298, 8
    %v303 = vpop.permute.xlu0 %302
    %v304 = vadd.f32 %v298, %v303
    %305 = vrot.lane.b32.xlu0 %v301, 16
    %v306 = vpop.permute.xlu0 %305
    %v307 = vadd.f32 %v301, %v306
    %308 = vrot.lane.b32.xlu0 %v304, 16
    %v309 = vpop.permute.xlu0 %308
    %v310 = vadd.f32 %v304, %v309
    %311 = vrot.lane.b32.xlu0 %v307, 32
    %v312 = vpop.permute.xlu0 %311
    %v313 = vadd.f32 %v307, %v312
    %314 = vrot.lane.b32.xlu0 %v310, 32
    %v315 = vpop.permute.xlu0 %314
    %v316 = vadd.f32 %v310, %v315
    %317 = vrot.lane.b32.xlu0 %v313, 64
    %v318 = vpop.permute.xlu0 %317
    %v319 = vadd.f32 %v313, %v318
    %320 = vrot.lane.b32.xlu0 %v316, 64
    %v321 = vpop.permute.xlu0 %320
    %v322 = vadd.f32 %v316, %v321
    %v323 = vmul.f32 %v319, 0.001953125
    %v324 = vmul.f32 %v322, 0.001953125
    %v325 = vmul.f32 %v323, %v323
    %v326 = vsub.f32 %v324, %v325
    %v327 = vmax.f32 %v326, 0.0
    %v328 = vadd.f32 %v327, 1e-05
    %v329 = vrsqrt.pop %v328
    %v330 = vmul.f32 %v329, %v328
    %v331 = vmul.f32 %v330, %v329
    %v332 = vmul.f32 0.5, %v331
    %v333 = vsub.f32 1.5, %v332
    %v334 = vmul.f32 %v329, %v333
    %vm335 = vweird.f32 %v328
    %vm336 = vweird.f32 %v329
    %vm337 = vmor %vm335, %vm336
    %v338 = vsel %vm337, %v329, %v334
    %v339 = vmul.f32 %v275, %v338
    %v340 = vmul.f32 %v323, %v339
    %v341 = vsub.f32 %v276, %v340
    %v343 = vperm.slane %v339, 0
    %v345 = vmul.f32 %v264, %v343
    %v346 = vmul.f32 %v267, %v343
    %v347 = vmul.f32 %v270, %v343
    %v348 = vmul.f32 %v273, %v343
    %v350 = vperm.slane %v341, 0
    %v352 = vadd.f32 %v345, %v350
    %v353 = vadd.f32 %v346, %v350
    %v354 = vadd.f32 %v347, %v350
    %v355 = vadd.f32 %v348, %v350
    %v356 = vmax.f32 %v352, 0.0
    %v357 = vmax.f32 %v353, 0.0
    %v358 = vmax.f32 %v354, 0.0
    %v359 = vmax.f32 %v355, 0.0
    %v364 = vrot.slane %v356, 7
    %v365 = vrot.slane %v357, 7
    %v366 = vsel %vm86, %v364, %v365
    %v367 = vrot.slane %v358, 7
    %v368 = vrot.slane %v359, 7
    %v369 = vsel %vm86, %v367, %v368
    %376 = vst [vmem:[#allocation2 + $0x18] sm:$0xfe] %v364
    %377 = vst [vmem:[#allocation2 + $0x30] sm:$0xff] %v366
    %378 = vst [vmem:[#allocation2 + $0x48] sm:$0x1] %v365
    %379 = vst [vmem:[#allocation2 + $0x78] sm:$0xfe] %v367
    %380 = vst [vmem:[#allocation2 + $0x90] sm:$0xff] %v369
    %381 = vst [vmem:[#allocation2 + $0xa8] sm:$0x1] %v368
    %382 = vst [vmem:[#allocation2 + $0x20] sm:$0xff] %v356
    %383 = vst [vmem:[#allocation2 + $0x38] sm:$0xff] %v357
    %384 = vst [vmem:[#allocation2 + $0x80] sm:$0xff] %v358
    %385 = vst [vmem:[#allocation2 + $0x98] sm:$0xff] %v359
    %v386 = vrot.slane %v356, 1
    %v387 = vrot.slane %v357, 1
    %v388 = vsel %vm109, %v386, %v387
    %v389 = vrot.slane %v358, 1
    %v390 = vrot.slane %v359, 1
    %v391 = vsel %vm109, %v389, %v390
    %398 = vst [vmem:[#allocation2 + $0x10] sm:$0x80] %v386
    %399 = vst [vmem:[#allocation2 + $0x28] sm:$0xff] %v388
    %400 = vst [vmem:[#allocation2 + $0x40] sm:$0x7f] %v387
    %401 = vst [vmem:[#allocation2 + $0x70] sm:$0x80] %v389
    %402 = vst [vmem:[#allocation2 + $0x88] sm:$0xff] %v391
    %403 = vst [vmem:[#allocation2 + $0xa0] sm:$0x7f] %v390
    %v404 = vld [vmem:[#allocation2 + $0x18] sm:$0xff]
    %v405 = vld [vmem:[#allocation2 + $0x20] sm:$0xff]
    %v406 = vld [vmem:[#allocation2 + $0x28] sm:$0xff]
    %v407 = vld [vmem:[#allocation2 + $0x30] sm:$0xff]
    %v408 = vld [vmem:[#allocation2 + $0x38] sm:$0xff]
    %v409 = vld [vmem:[#allocation2 + $0x40] sm:$0xff]
    %v410 = vld [vmem:[#allocation2 + $0x78] sm:$0xff]
    %v411 = vld [vmem:[#allocation2 + $0x80] sm:$0xff]
    %v412 = vld [vmem:[#allocation2 + $0x88] sm:$0xff]
    %v413 = vld [vmem:[#allocation2 + $0x90] sm:$0xff]
    %v414 = vld [vmem:[#allocation2 + $0x98] sm:$0xff]
    %v415 = vld [vmem:[#allocation2 + $0xa0] sm:$0xff]
    %v416 = vld [vmem:[#allocation8] sm:$0xff]
    %v417 = vld [vmem:[#allocation8 + $0x8] sm:$0xff]
    %v418 = vld [vmem:[#allocation8 + $0x10] sm:$0xff]
    %v419 = vld [vmem:[#allocation8 + $0x18] sm:$0xff]
    %v420 = vld [vmem:[#allocation8 + $0x20] sm:$0xff]
    %v421 = vld [vmem:[#allocation8 + $0x28] sm:$0xff]
    %v422 = vld [vmem:[#allocation8 + $0x30] sm:$0xff]
    %v423 = vld [vmem:[#allocation8 + $0x38] sm:$0xff]
    %v424 = vld [vmem:[#allocation8 + $0x40] sm:$0xff]
    %v425 = vld [vmem:[#allocation8 + $0x48] sm:$0xff]
    %v426 = vld [vmem:[#allocation8 + $0x50] sm:$0xff]
    %v427 = vld [vmem:[#allocation8 + $0x58] sm:$0xff]
    %v428 = vld [vmem:[#allocation8 + $0x60] sm:$0xff]
    %v429 = vld [vmem:[#allocation8 + $0x68] sm:$0xff]
    %v430 = vld [vmem:[#allocation8 + $0x70] sm:$0xff]
    %v431 = vld [vmem:[#allocation8 + $0x78] sm:$0xff]
    %v432 = vld [vmem:[#allocation8 + $0x80] sm:$0xff]
    %v433 = vld [vmem:[#allocation8 + $0x88] sm:$0xff]
    %v434 = vld [vmem:[#allocation8 + $0x90] sm:$0xff]
    %v435 = vld [vmem:[#allocation8 + $0x98] sm:$0xff]
    %v436 = vld [vmem:[#allocation8 + $0xa0] sm:$0xff]
    %v437 = vld [vmem:[#allocation8 + $0xa8] sm:$0xff]
    %v438 = vld [vmem:[#allocation8 + $0xb0] sm:$0xff]
    %v439 = vld [vmem:[#allocation8 + $0xb8] sm:$0xff]
    %v440 = vld [vmem:[#allocation8 + $0xc0] sm:$0xff]
    %v441 = vld [vmem:[#allocation8 + $0xc8] sm:$0xff]
    %v442 = vld [vmem:[#allocation8 + $0xd0] sm:$0xff]
    %v443 = vld [vmem:[#allocation8 + $0xd8] sm:$0xff]
    %v444 = vld [vmem:[#allocation8 + $0xe0] sm:$0xff]
    %v445 = vld [vmem:[#allocation8 + $0xe8] sm:$0xff]
    %v446 = vld [vmem:[#allocation8 + $0xf0] sm:$0xff]
    %v447 = vld [vmem:[#allocation8 + $0xf8] sm:$0xff]
    %v448 = vld [vmem:[#allocation8 + $0x100] sm:$0xff]
    %v449 = vld [vmem:[#allocation8 + $0x108] sm:$0xff]
    %v450 = vld [vmem:[#allocation8 + $0x110] sm:$0xff]
    %v451 = vld [vmem:[#allocation8 + $0x118] sm:$0xff]
    %v452 = vld [vmem:[#allocation8 + $0x120] sm:$0xff]
    %v453 = vld [vmem:[#allocation8 + $0x128] sm:$0xff]
    %v454 = vld [vmem:[#allocation8 + $0x130] sm:$0xff]
    %v455 = vld [vmem:[#allocation8 + $0x138] sm:$0xff]
    %v456 = vld [vmem:[#allocation8 + $0x140] sm:$0xff]
    %v457 = vld [vmem:[#allocation8 + $0x148] sm:$0xff]
    %v458 = vld [vmem:[#allocation8 + $0x150] sm:$0xff]
    %v459 = vld [vmem:[#allocation8 + $0x158] sm:$0xff]
    %v460 = vld [vmem:[#allocation8 + $0x160] sm:$0xff]
    %v461 = vld [vmem:[#allocation8 + $0x168] sm:$0xff]
    %v462 = vld [vmem:[#allocation8 + $0x170] sm:$0xff]
    %v463 = vld [vmem:[#allocation8 + $0x178] sm:$0xff]
    %464 = vmatpush.msra.mxu0 %v431
    %465 = vmatpush.msra.mxu0 %v430
    %466 = vmatpush.msra.mxu0 %v429
    %467 = vmatpush.msra.mxu0 %v428
    %468 = vmatpush.msra.mxu0 %v427
    %469 = vmatpush.msra.mxu0 %v426
    %470 = vmatpush.msra.mxu0 %v425
    %471 = vmatpush.msra.mxu0 %v424
    %472 = vmatpush.msra.mxu0 %v423
    %473 = vmatpush.msra.mxu0 %v422
    %474 = vmatpush.msra.mxu0 %v421
    %475 = vmatpush.msra.mxu0 %v420
    %476 = vmatpush.msra.mxu0 %v419
    %477 = vmatpush.msra.mxu0 %v418
    %478 = vmatpush.msra.mxu0 %v417
    %479 = vmatpush.msra.mxu0 %v416
    %480 = vmatmul.f32.gmra.mxu0 %v404
    %v481 = vpop.f32.mrf.mxu0
    %v482 = vadd.f32 0.0, %v481
    %483 = vmatmul.f32.gmra.mxu0 %v407
    %v484 = vpop.f32.mrf.mxu0
    %v485 = vadd.f32 0.0, %v484
    %486 = vmatmul.f32.gmra.mxu0 %v410
    %v487 = vpop.f32.mrf.mxu0
    %v488 = vadd.f32 0.0, %v487
    %489 = vmatmul.f32.gmra.mxu0 %v413
    %v490 = vpop.f32.mrf.mxu0
    %v491 = vadd.f32 0.0, %v490
    %492 = vdwg.mxu0
    %493 = vmatpush.msra.mxu0 %v447
    %494 = vmatpush.msra.mxu0 %v446
    %495 = vmatpush.msra.mxu0 %v445
    %496 = vmatpush.msra.mxu0 %v444
    %497 = vmatpush.msra.mxu0 %v443
    %498 = vmatpush.msra.mxu0 %v442
    %499 = vmatpush.msra.mxu0 %v441
    %500 = vmatpush.msra.mxu0 %v440
    %501 = vmatpush.msra.mxu0 %v439
    %502 = vmatpush.msra.mxu0 %v438
    %503 = vmatpush.msra.mxu0 %v437
    %504 = vmatpush.msra.mxu0 %v436
    %505 = vmatpush.msra.mxu0 %v435
    %506 = vmatpush.msra.mxu0 %v434
    %507 = vmatpush.msra.mxu0 %v433
    %508 = vmatpush.msra.mxu0 %v432
    %509 = vmatmul.f32.gmra.mxu0 %v405
    %v510 = vpop.f32.mrf.mxu0
    %v511 = vadd.f32 %v482, %v510
    %512 = vmatmul.f32.gmra.mxu0 %v408
    %v513 = vpop.f32.mrf.mxu0
    %v514 = vadd.f32 %v485, %v513
    %515 = vmatmul.f32.gmra.mxu0 %v411
    %v516 = vpop.f32.mrf.mxu0
    %v517 = vadd.f32 %v488, %v516
    %518 = vmatmul.f32.gmra.mxu0 %v414
    %v519 = vpop.f32.mrf.mxu0
    %v520 = vadd.f32 %v491, %v519
    %521 = vdwg.mxu0
    %522 = vmatpush.msra.mxu0 %v463
    %523 = vmatpush.msra.mxu0 %v462
    %524 = vmatpush.msra.mxu0 %v461
    %525 = vmatpush.msra.mxu0 %v460
    %526 = vmatpush.msra.mxu0 %v459
    %527 = vmatpush.msra.mxu0 %v458
    %528 = vmatpush.msra.mxu0 %v457
    %529 = vmatpush.msra.mxu0 %v456
    %530 = vmatpush.msra.mxu0 %v455
    %531 = vmatpush.msra.mxu0 %v454
    %532 = vmatpush.msra.mxu0 %v453
    %533 = vmatpush.msra.mxu0 %v452
    %534 = vmatpush.msra.mxu0 %v451
    %535 = vmatpush.msra.mxu0 %v450
    %536 = vmatpush.msra.mxu0 %v449
    %537 = vmatpush.msra.mxu0 %v448
    %538 = vmatmul.f32.gmra.mxu0 %v406
    %v539 = vpop.f32.mrf.mxu0
    %v540 = vadd.f32 %v511, %v539
    %541 = vmatmul.f32.gmra.mxu0 %v409
    %v542 = vpop.f32.mrf.mxu0
    %v543 = vadd.f32 %v514, %v542
    %544 = vmatmul.f32.gmra.mxu0 %v412
    %v545 = vpop.f32.mrf.mxu0
    %v546 = vadd.f32 %v517, %v545
    %547 = vmatmul.f32.gmra.mxu0 %v415
    %v548 = vpop.f32.mrf.mxu0
    %v549 = vadd.f32 %v520, %v548
    %550 = vdwg.mxu0
    %v551 = vld [vmem:[%s5] sm:$0x1]
    %v552 = vld [vmem:[%s6] sm:$0x1]
    %v553 = vadd.f32 %v540, %v543
    %v554 = vadd.f32 %v553, %v546
    %v555 = vadd.f32 %v554, %v549
    %v556 = vrot.slane %v555, 4
    %v557 = vadd.f32 %v555, %v556
    %v558 = vrot.slane %v557, 2
    %v559 = vadd.f32 %v557, %v558
    %v560 = vrot.slane %v559, 1
    %v561 = vadd.f32 %v559, %v560
    %v562 = vmul.f32 %v540, %v540
    %v563 = vmul.f32 %v543, %v543
    %v564 = vmul.f32 %v546, %v546
    %v565 = vmul.f32 %v549, %v549
    %v566 = vadd.f32 %v562, %v563
    %v567 = vadd.f32 %v566, %v564
    %v568 = vadd.f32 %v567, %v565
    %v569 = vrot.slane %v568, 4
    %v570 = vadd.f32 %v568, %v569
    %v571 = vrot.slane %v570, 2
    %v572 = vadd.f32 %v570, %v571
    %v573 = vrot.slane %v572, 1
    %v574 = vadd.f32 %v572, %v573
    %575 = vrot.lane.b32.xlu0 %v561, 8
    %v576 = vpop.permute.xlu0 %575
    %v577 = vadd.f32 %v561, %v576
    %578 = vrot.lane.b32.xlu0 %v574, 8
    %v579 = vpop.permute.xlu0 %578
    %v580 = vadd.f32 %v574, %v579
    %581 = vrot.lane.b32.xlu0 %v577, 16
    %v582 = vpop.permute.xlu0 %581
    %v583 = vadd.f32 %v577, %v582
    %584 = vrot.lane.b32.xlu0 %v580, 16
    %v585 = vpop.permute.xlu0 %584
    %v586 = vadd.f32 %v580, %v585
    %587 = vrot.lane.b32.xlu0 %v583, 32
    %v588 = vpop.permute.xlu0 %587
    %v589 = vadd.f32 %v583, %v588
    %590 = vrot.lane.b32.xlu0 %v586, 32
    %v591 = vpop.permute.xlu0 %590
    %v592 = vadd.f32 %v586, %v591
    %593 = vrot.lane.b32.xlu0 %v589, 64
    %v594 = vpop.permute.xlu0 %593
    %v595 = vadd.f32 %v589, %v594
    %596 = vrot.lane.b32.xlu0 %v592, 64
    %v597 = vpop.permute.xlu0 %596
    %v598 = vadd.f32 %v592, %v597
    %v599 = vmul.f32 %v595, 0.001953125
    %v600 = vmul.f32 %v598, 0.001953125
    %v601 = vmul.f32 %v599, %v599
    %v602 = vsub.f32 %v600, %v601
    %v603 = vmax.f32 %v602, 0.0
    %v604 = vadd.f32 %v603, 1e-05
    %v605 = vrsqrt.pop %v604
    %v606 = vmul.f32 %v605, %v604
    %v607 = vmul.f32 %v606, %v605
    %v608 = vmul.f32 0.5, %v607
    %v609 = vsub.f32 1.5, %v608
    %v610 = vmul.f32 %v605, %v609
    %vm611 = vweird.f32 %v604
    %vm612 = vweird.f32 %v605
    %vm613 = vmor %vm611, %vm612
    %v614 = vsel %vm613, %v605, %v610
    %v615 = vmul.f32 %v551, %v614
    %v616 = vmul.f32 %v599, %v615
    %v617 = vsub.f32 %v552, %v616
    %v619 = vperm.slane %v615, 0
    %v621 = vmul.f32 %v540, %v619
    %v622 = vmul.f32 %v543, %v619
    %v623 = vmul.f32 %v546, %v619
    %v624 = vmul.f32 %v549, %v619
    %v626 = vperm.slane %v617, 0
    %v628 = vadd.f32 %v621, %v626
    %v629 = vadd.f32 %v622, %v626
    %v630 = vadd.f32 %v623, %v626
    %v631 = vadd.f32 %v624, %v626
    %v632 = vadd.f32 %v628, %v78
    %v633 = vadd.f32 %v629, %v79
    %v634 = vadd.f32 %v630, %v80
    %v635 = vadd.f32 %v631, %v81
    %v636 = vmax.f32 %v632, 0.0
    %v637 = vmax.f32 %v633, 0.0
    %v638 = vmax.f32 %v634, 0.0
    %v639 = vmax.f32 %v635, 0.0
    %640 = vst [vmem:[#allocation9] sm:$0xff] %v636
    %641 = vst [vmem:[#allocation9 + $0x8] sm:$0xff] %v637
    %642 = vst [vmem:[#allocation9 + $0x10] sm:$0xff] %v638
    %643 = vst [vmem:[#allocation9 + $0x18] sm:$0xff] %v639
    // Predicated region
    $region42: #{tpu_custom_call.1} parent=1 // pred_check
      _
    $region43: #{tpu_custom_call.1} parent=1 // pred_check_branch
      %645 = sbr.rel (0) target = $region45
    $region44: #{tpu_custom_call.1} parent=1 // pred_region
      %647 = vsyncadd [#allocation5], 0
      %s648 = sshll.u32 [#allocation9], 4
      %s649 = int_to_ptr.vmem [resolvable:$true] %s648
      %s650 = sshll.u32 %s7, 4
      %s651 = int_to_ptr.hbm [resolvable:$true] %s650
      %656 = dma.vmem_to_hbm [thread:$0]  %s649, 512, %s651, [#allocation5], 128, 128, 8
    $region45: #{tpu_custom_call.1} parent=1 // pred_fallthru
      _
    // Predicated region
    $region46: #{tpu_custom_call.1} parent=1 // pred_check
      _
    $region47: #{tpu_custom_call.1} parent=1 // pred_check_branch
      %658 = sbr.rel (0) target = $region49
    $region48: #{tpu_custom_call.1} parent=1 // pred_region
      %660 = dma.done [#allocation5], 512
    $region49: #{tpu_custom_call.1} parent=1 // pred_fallthru
      _
    %661 = vsyncpa [#allocation4], 1
    %662 = vsyncpa [#allocation7], 1
    %663 = vsyncpa [#allocation5], 1

</llo_original>
